<compile_context>
chip_gen: v5e
topology: v5e:2x2
jax: 0.10.0
libtpu: 0.0.40
codegen_flags: <defaults>
</compile_context>

<pallas_src>
import jax
import jax.numpy as jnp
from jax import lax
from jax.experimental import pallas as pl
from jax.experimental.pallas import tpu as pltpu


def _autoencoder_kernel(x_ref, we_ref, be_ref, wd_ref, bd_ref,
                        emb_ref, out_ref):
    """One batch tile: fused encoder + decoder (MXU matmuls, f32 accumulate).

    x_ref  : [TB, D_in]
    we_ref : [D_emb, D_in]   (PyTorch layout; contracted on last dim)
    be_ref : [1, D_emb]
    wd_ref : [D_in, D_emb]   (PyTorch layout; contracted on last dim)
    bd_ref : [1, D_in]
    emb_ref: [TB, D_emb]     (output 1: X_embedded)
    out_ref: [TB, D_in]      (output 2: X_output)
    """
    x = x_ref[...]

    # Encoder: x @ We^T + be. dot_general contracts x's last dim against the
    # weight's last dim, so the PyTorch [out, in] layout is used directly
    # (the MXU handles the transposed operand for free).
    emb_acc = lax.dot_general(
        x, we_ref[...],
        dimension_numbers=(((1,), (1,)), ((), ())),
        preferred_element_type=jnp.float32)
    emb_acc = emb_acc + be_ref[...].astype(jnp.float32)
    emb = emb_acc.astype(emb_ref.dtype)
    emb_ref[...] = emb

    # Decoder: emb @ Wd^T + bd. `emb` never leaves VMEM.
    out_acc = lax.dot_general(
        emb, wd_ref[...],
        dimension_numbers=(((1,), (1,)), ((), ())),
        preferred_element_type=jnp.float32)
    out_acc = out_acc + bd_ref[...].astype(jnp.float32)
    out_ref[...] = out_acc.astype(out_ref.dtype)


def autoencoder_forward(x, w_enc, b_enc, w_dec, b_dec, *,
                        batch_tile=512,
                        vmem_limit_bytes=48 * 1024 * 1024):
    """x: [B, D_in]; w_enc: [D_emb, D_in]; b_enc: [D_emb];
    w_dec: [D_in, D_emb]; b_dec: [D_in]  (PyTorch nn.Linear conventions).

    Returns (X_embedded [B, D_emb], X_output [B, D_in])."""
    B, D_in = x.shape
    D_emb = w_enc.shape[0]
    assert w_enc.shape == (D_emb, D_in)
    assert w_dec.shape == (D_in, D_emb)

    # Batch tile: the whole batch if it fits the requested tile, otherwise the
    # largest multiple of 8 <= batch_tile (satisfies the (8,128) block rule;
    # Pallas masks the ragged last tile).
    if B <= batch_tile:
        tb = B
    else:
        tb = max(8, (batch_tile // 8) * 8)

    # TODO(synk): for production shapes, pad D_emb to a multiple of 128 (zero
    # columns in We / zero rows in Wd) so the embedding writeback is lane-dense
    # instead of masked vst; slice emb back to the true width in the wrapper.

    be = b_enc.reshape(1, D_emb)
    bd = b_dec.reshape(1, D_in)

    grid = (pl.cdiv(B, tb),)

    emb, out = pl.pallas_call(
        _autoencoder_kernel,
        out_shape=(
            jax.ShapeDtypeStruct((B, D_emb), x.dtype),
            jax.ShapeDtypeStruct((B, D_in), x.dtype),
        ),
        grid=grid,
        in_specs=[
            pl.BlockSpec((tb, D_in), lambda i: (i, 0)),       # x: tiled over batch
            pl.BlockSpec((D_emb, D_in), lambda i: (0, 0)),    # encoder W: resident
            pl.BlockSpec((1, D_emb), lambda i: (0, 0)),       # encoder b: resident
            pl.BlockSpec((D_in, D_emb), lambda i: (0, 0)),    # decoder W: resident
            pl.BlockSpec((1, D_in), lambda i: (0, 0)),        # decoder b: resident
        ],
        out_specs=[
            pl.BlockSpec((tb, D_emb), lambda i: (i, 0)),      # X_embedded
            pl.BlockSpec((tb, D_in), lambda i: (i, 0)),       # X_output
        ],
        compiler_params=pltpu.CompilerParams(
            dimension_semantics=("parallel",),                # megacore on v7x
            vmem_limit_bytes=vmem_limit_bytes),
    )(x, w_enc, be, w_dec, bd)
    return emb, out


def init_linear_params(key, in_features, out_features, dtype=jnp.float32):
    """Deterministic init mimicking PyTorch nn.Linear default:
    U(-1/sqrt(in), 1/sqrt(in)) for both weight and bias."""
    k_w, k_b = jax.random.split(key)
    bound = 1.0 / jnp.sqrt(in_features)
    w = jax.random.uniform(k_w, (out_features, in_features), dtype,
                           minval=-bound, maxval=bound)
    b = jax.random.uniform(k_b, (out_features,), dtype,
                           minval=-bound, maxval=bound)
    return w, b


def reference_forward(x, w_enc, b_enc, w_dec, b_dec):
    emb = x @ w_enc.T + b_enc
    out = emb @ w_dec.T + b_dec
    return emb, out


if __name__ == "__main__":
    # Small shapes consistent with the module: batch=8, input_dim=64, emb=32.
    B, INPUT_DIM, EMBEDDING_DIM = 8, 64, 32

    key = jax.random.PRNGKey(0)
    k_x, k_enc, k_dec = jax.random.split(key, 3)

    x = jax.random.normal(k_x, (B, INPUT_DIM), jnp.float32)
    w_enc, b_enc = init_linear_params(k_enc, INPUT_DIM, EMBEDDING_DIM)
    w_dec, b_dec = init_linear_params(k_dec, EMBEDDING_DIM, INPUT_DIM)

    emb, out = autoencoder_forward(x, w_enc, b_enc, w_dec, b_dec)
    emb = jax.block_until_ready(emb)
    out = jax.block_until_ready(out)

    # Sanity check against a pure-JAX reference.
    emb_ref, out_ref = reference_forward(x, w_enc, b_enc, w_dec, b_dec)
    assert emb.shape == (B, EMBEDDING_DIM)
    assert out.shape == (B, INPUT_DIM)
    assert jnp.allclose(emb, emb_ref, atol=1e-5, rtol=1e-5)
    assert jnp.allclose(out, out_ref, atol=1e-5, rtol=1e-5)

    print("KERNEL_OK")
</pallas_src>

<mosaic_0001>
module attributes {stable_mosaic.version = 11 : i64} {
  func.func @_autoencoder_kernel(%arg0: i32, %arg1: memref<8x64xf32, #tpu.memory_space<vmem>>, %arg2: memref<32x64xf32, #tpu.memory_space<vmem>>, %arg3: memref<1x32xf32, #tpu.memory_space<vmem>>, %arg4: memref<64x32xf32, #tpu.memory_space<vmem>>, %arg5: memref<1x64xf32, #tpu.memory_space<vmem>>, %arg6: memref<8x32xf32, #tpu.memory_space<vmem>>, %arg7: memref<8x64xf32, #tpu.memory_space<vmem>>) attributes {dimension_semantics = [#tpu.dimension_semantics<parallel>], iteration_bounds = array<i64: 1>, scalar_prefetch = 0 : i64, scratch_operands = 0 : i64, tpu.core_type = #tpu.core_type<tc>, window_params = [{transform_indices = @transform_0, window_bounds = array<i64: 8, 64>}, {pipeline_mode = #tpu.pipeline_mode<synchronous>, transform_indices = @transform_1, window_bounds = array<i64: 32, 64>}, {pipeline_mode = #tpu.pipeline_mode<synchronous>, transform_indices = @transform_2, window_bounds = array<i64: 1, 32>}, {pipeline_mode = #tpu.pipeline_mode<synchronous>, transform_indices = @transform_3, window_bounds = array<i64: 64, 32>}, {pipeline_mode = #tpu.pipeline_mode<synchronous>, transform_indices = @transform_4, window_bounds = array<i64: 1, 64>}, {transform_indices = @transform_5, window_bounds = array<i64: 8, 32>}, {transform_indices = @transform_6, window_bounds = array<i64: 8, 64>}]} {
    %c0 = arith.constant 0 : index
    %c0_0 = arith.constant 0 : index
    %0 = vector.load %arg1[%c0, %c0_0] : memref<8x64xf32, #tpu.memory_space<vmem>>, vector<8x64xf32>
    %c0_1 = arith.constant 0 : index
    %c0_2 = arith.constant 0 : index
    %1 = vector.load %arg2[%c0_1, %c0_2] : memref<32x64xf32, #tpu.memory_space<vmem>>, vector<32x64xf32>
    %cst = arith.constant dense<0.000000e+00> : vector<8x32xf32>
    %2 = tpu.matmul %0, %1, %cst {dimension_numbers = #tpu.dot_dimension_numbers<[1], [1], [0], [0], [0, 0, 1, 0], [], []>} : vector<8x64xf32>, vector<32x64xf32>, vector<8x32xf32> -> vector<8x32xf32>
    %c0_3 = arith.constant 0 : index
    %c0_4 = arith.constant 0 : index
    %3 = vector.load %arg3[%c0_3, %c0_4] : memref<1x32xf32, #tpu.memory_space<vmem>>, vector<1x32xf32>
    %4 = vector.broadcast %3 : vector<1x32xf32> to vector<8x32xf32>
    %5 = arith.addf %2, %4 : vector<8x32xf32>
    %c0_5 = arith.constant 0 : index
    %c0_6 = arith.constant 0 : index
    %6 = vector.load %arg6[%c0_5, %c0_6] : memref<8x32xf32, #tpu.memory_space<vmem>>, vector<8x32xf32>
    tpu.vector_store %arg6[%c0_5, %c0_6], %5 {strides = array<i32>} : memref<8x32xf32, #tpu.memory_space<vmem>>, vector<8x32xf32>,
    %c0_7 = arith.constant 0 : index
    %c0_8 = arith.constant 0 : index
    %7 = vector.load %arg4[%c0_7, %c0_8] : memref<64x32xf32, #tpu.memory_space<vmem>>, vector<64x32xf32>
    %cst_9 = arith.constant dense<0.000000e+00> : vector<8x64xf32>
    %8 = tpu.matmul %5, %7, %cst_9 {dimension_numbers = #tpu.dot_dimension_numbers<[1], [1], [0], [0], [0, 0, 1, 0], [], []>} : vector<8x32xf32>, vector<64x32xf32>, vector<8x64xf32> -> vector<8x64xf32>
    %c0_10 = arith.constant 0 : index
    %c0_11 = arith.constant 0 : index
    %9 = vector.load %arg5[%c0_10, %c0_11] : memref<1x64xf32, #tpu.memory_space<vmem>>, vector<1x64xf32>
    %10 = vector.broadcast %9 : vector<1x64xf32> to vector<8x64xf32>
    %11 = arith.addf %8, %10 : vector<8x64xf32>
    %c0_12 = arith.constant 0 : index
    %c0_13 = arith.constant 0 : index
    %12 = vector.load %arg7[%c0_12, %c0_13] : memref<8x64xf32, #tpu.memory_space<vmem>>, vector<8x64xf32>
    tpu.vector_store %arg7[%c0_12, %c0_13], %11 {strides = array<i32>} : memref<8x64xf32, #tpu.memory_space<vmem>>, vector<8x64xf32>,
    return
  }
  func.func @transform_0(%arg0: i32) -> (i32, i32) {
    %c0_i32 = arith.constant 0 : i32
    %c0_i32_0 = arith.constant 0 : i32
    return %arg0, %c0_i32 : i32, i32
  }
  func.func @transform_1(%arg0: i32) -> (i32, i32) {
    %c0_i32 = arith.constant 0 : i32
    %c0_i32_0 = arith.constant 0 : i32
    %c0_i32_1 = arith.constant 0 : i32
    return %c0_i32, %c0_i32_0 : i32, i32
  }
  func.func @transform_2(%arg0: i32) -> (i32, i32) {
    %c0_i32 = arith.constant 0 : i32
    %c0_i32_0 = arith.constant 0 : i32
    %c0_i32_1 = arith.constant 0 : i32
    return %c0_i32, %c0_i32_0 : i32, i32
  }
  func.func @transform_3(%arg0: i32) -> (i32, i32) {
    %c0_i32 = arith.constant 0 : i32
    %c0_i32_0 = arith.constant 0 : i32
    %c0_i32_1 = arith.constant 0 : i32
    return %c0_i32, %c0_i32_0 : i32, i32
  }
  func.func @transform_4(%arg0: i32) -> (i32, i32) {
    %c0_i32 = arith.constant 0 : i32
    %c0_i32_0 = arith.constant 0 : i32
    %c0_i32_1 = arith.constant 0 : i32
    return %c0_i32, %c0_i32_0 : i32, i32
  }
  func.func @transform_5(%arg0: i32) -> (i32, i32) {
    %c0_i32 = arith.constant 0 : i32
    %c0_i32_0 = arith.constant 0 : i32
    return %arg0, %c0_i32 : i32, i32
  }
  func.func @transform_6(%arg0: i32) -> (i32, i32) {
    %c0_i32 = arith.constant 0 : i32
    %c0_i32_0 = arith.constant 0 : i32
    return %arg0, %c0_i32 : i32, i32
  }
}

</mosaic_0001>

<llo_original>
// kernel: tpu_custom_call.1
$region0: #{tpu_custom_call.1}
  #allocation0 [shape = 'u32[]', space=smem, size = 0x4, offset = 0x4, fixed_abs, tag = 'smem constant byte address 0x4 - core index']
  #allocation1 [shape = 'u32[72,128]{1,0:T(1,128)}', space=vmem, size = 0x9000, scoped, tag = 'internal scratch']
  %s0 = inlined_call_operand.vmem [shape: f32[8,64], index: 0, kind: input, shape index: {}]
  %s1 = inlined_call_operand.vmem [shape: f32[32,64], index: 1, kind: input, shape index: {}]
  %s2 = inlined_call_operand.vmem [shape: f32[1,32], index: 2, kind: input, shape index: {}]
  %s3 = inlined_call_operand.vmem [shape: f32[64,32], index: 3, kind: input, shape index: {}]
  %s4 = inlined_call_operand.vmem [shape: f32[1,64], index: 4, kind: input, shape index: {}]
  %s5 = inlined_call_operand.hbm [shape: f32[8,32], index: 5, kind: output, shape index: {0}]
  %s6 = inlined_call_operand.hbm [shape: f32[8,64], index: 6, kind: output, shape index: {1}]
  %7 = xla_tuple %s5, %s6
  %s8 = sld [smem:[#allocation0]]
  $region38: #{tpu_custom_call.1} parent=0
    _
  %s10 = ssub.s32 1, %s8
  %s11 = scalar_select 0, %s10, %s8
  $region1: #{tpu_custom_call.1} parent=0
    #allocation2 [shape = 'u8[4096]{0}', space=vmem, size = 0x1000, scoped, tag = 'output window, operand 0, single buffered']
    #allocation3 [shape = 's32[1]{0}', space=sflag, size = 0x4, scoped, tag = 'scoped memory for tpu_custom_call.1']
    #allocation4 [shape = 'u8[4096]{0}', space=vmem, size = 0x1000, scoped, tag = 'output window, operand 1, single buffered']
    #allocation5 [shape = 's32[1]{0}', space=sflag, size = 0x4, scoped, tag = 'scoped memory for tpu_custom_call.1']
    %12 = vsyncpa [#allocation3], 0
    %13 = vsyncpa [#allocation5], 0
    // Predicated region
    $region2: #{tpu_custom_call.1} parent=1 // pred_check
      _
    $region3: #{tpu_custom_call.1} parent=1 // pred_check_branch
      %15 = sbr.rel (0) target = $region5
    $region4: #{tpu_custom_call.1} parent=1 // pred_region
      _
    $region5: #{tpu_custom_call.1} parent=1 // pred_fallthru
      _
    // Predicated region
    $region6: #{tpu_custom_call.1} parent=1 // pred_check
      _
    $region7: #{tpu_custom_call.1} parent=1 // pred_check_branch
      %17 = sbr.rel (0) target = $region9
    $region8: #{tpu_custom_call.1} parent=1 // pred_region
      _
    $region9: #{tpu_custom_call.1} parent=1 // pred_fallthru
      _
    // Predicated region
    $region10: #{tpu_custom_call.1} parent=1 // pred_check
      _
    $region11: #{tpu_custom_call.1} parent=1 // pred_check_branch
      %19 = sbr.rel (0) target = $region13
    $region12: #{tpu_custom_call.1} parent=1 // pred_region
      _
    $region13: #{tpu_custom_call.1} parent=1 // pred_fallthru
      _
    // Predicated region
    $region14: #{tpu_custom_call.1} parent=1 // pred_check
      _
    $region15: #{tpu_custom_call.1} parent=1 // pred_check_branch
      %21 = sbr.rel (0) target = $region17
    $region16: #{tpu_custom_call.1} parent=1 // pred_region
      _
    $region17: #{tpu_custom_call.1} parent=1 // pred_fallthru
      _
    // Predicated region
    $region18: #{tpu_custom_call.1} parent=1 // pred_check
      _
    $region19: #{tpu_custom_call.1} parent=1 // pred_check_branch
      %23 = sbr.rel (0) target = $region21
    $region20: #{tpu_custom_call.1} parent=1 // pred_region
      _
    $region21: #{tpu_custom_call.1} parent=1 // pred_fallthru
      _
    %v24 = vld [vmem:[%s0] sm:$0xff]
    %v25 = vld [vmem:[%s1] sm:$0xff]
    %v26 = vld [vmem:[%s1 + $0x8] sm:$0xff]
    %v27 = vld [vmem:[%s1 + $0x10] sm:$0xff]
    %v28 = vld [vmem:[%s1 + $0x18] sm:$0xff]
    %v29 = vld [vmem:[%s2] sm:$0x1]
    %v31 = vperm.slane %v29, 0
    %vm33 = vcmask 523264
    %v35 = vsel %vm33, %v24, 0
    %v38 = vsel %vm33, %v25, 0
    %v41 = vsel %vm33, %v26, 0
    %v44 = vsel %vm33, %v27, 0
    %v47 = vsel %vm33, %v28, 0
    %49 = vmatpush.xpose.msra.mxu0 0.0
    %50 = vmatpush.xpose.msra.mxu0 0.0
    %51 = vmatpush.xpose.msra.mxu0 0.0
    %52 = vmatpush.xpose.msra.mxu0 0.0
    %53 = vmatpush.xpose.msra.mxu0 0.0
    %54 = vmatpush.xpose.msra.mxu0 0.0
    %55 = vmatpush.xpose.msra.mxu0 0.0
    %56 = vmatpush.xpose.msra.mxu0 0.0
    %57 = vmatpush.xpose.msra.mxu0 0.0
    %58 = vmatpush.xpose.msra.mxu0 0.0
    %59 = vmatpush.xpose.msra.mxu0 0.0
    %60 = vmatpush.xpose.msra.mxu0 0.0
    %61 = vmatpush.xpose.msra.mxu0 %v47
    %62 = vmatpush.xpose.msra.mxu0 %v44
    %63 = vmatpush.xpose.msra.mxu0 %v41
    %64 = vmatpush.xpose.msra.mxu0 %v38
    %65 = vmatmul.f32.gmra.mxu0 %v35
    %v66 = vpop.f32.mrf.mxu0
    %v67 = vadd.f32 %v31, %v66
    %68 = vdwg.mxu0
    %vm69 = vcmask 261120
    %70 = vst.msk [vmem:[#allocation2] sm:$0xff] %vm69, %v67
    %v71 = vld [vmem:[%s3] sm:$0xff]
    %v72 = vld [vmem:[%s3 + $0x8] sm:$0xff]
    %v73 = vld [vmem:[%s3 + $0x10] sm:$0xff]
    %v74 = vld [vmem:[%s3 + $0x18] sm:$0xff]
    %v75 = vld [vmem:[%s3 + $0x20] sm:$0xff]
    %v76 = vld [vmem:[%s3 + $0x28] sm:$0xff]
    %v77 = vld [vmem:[%s3 + $0x30] sm:$0xff]
    %v78 = vld [vmem:[%s3 + $0x38] sm:$0xff]
    %v79 = vld [vmem:[%s4] sm:$0x1]
    %v81 = vperm.slane %v79, 0
    %v84 = vsel %vm69, %v67, 0
    %v87 = vsel %vm69, %v71, 0
    %v90 = vsel %vm69, %v72, 0
    %v93 = vsel %vm69, %v73, 0
    %v96 = vsel %vm69, %v74, 0
    %v99 = vsel %vm69, %v75, 0
    %v102 = vsel %vm69, %v76, 0
    %v105 = vsel %vm69, %v77, 0
    %v108 = vsel %vm69, %v78, 0
    %110 = vmatpush.xpose.msra.mxu0 0.0
    %111 = vmatpush.xpose.msra.mxu0 0.0
    %112 = vmatpush.xpose.msra.mxu0 0.0
    %113 = vmatpush.xpose.msra.mxu0 0.0
    %114 = vmatpush.xpose.msra.mxu0 0.0
    %115 = vmatpush.xpose.msra.mxu0 0.0
    %116 = vmatpush.xpose.msra.mxu0 0.0
    %117 = vmatpush.xpose.msra.mxu0 0.0
    %118 = vmatpush.xpose.msra.mxu0 %v108
    %119 = vmatpush.xpose.msra.mxu0 %v105
    %120 = vmatpush.xpose.msra.mxu0 %v102
    %121 = vmatpush.xpose.msra.mxu0 %v99
    %122 = vmatpush.xpose.msra.mxu0 %v96
    %123 = vmatpush.xpose.msra.mxu0 %v93
    %124 = vmatpush.xpose.msra.mxu0 %v90
    %125 = vmatpush.xpose.msra.mxu0 %v87
    %126 = vmatmul.f32.gmra.mxu0 %v84
    %v127 = vpop.f32.mrf.mxu0
    %v128 = vadd.f32 %v81, %v127
    %129 = vdwg.mxu0
    %130 = vst.msk [vmem:[#allocation4] sm:$0xff] %vm33, %v128
    // Predicated region
    $region22: #{tpu_custom_call.1} parent=1 // pred_check
      _
    $region23: #{tpu_custom_call.1} parent=1 // pred_check_branch
      %132 = sbr.rel (0) target = $region25
    $region24: #{tpu_custom_call.1} parent=1 // pred_region
      %134 = vsyncadd [#allocation3], 0
      %s136 = sshll.u32 [#allocation2], 4
      %s137 = int_to_ptr.vmem [resolvable:$true] %s136
      %s138 = sshll.u32 %s5, 4
      %s139 = int_to_ptr.hbm [resolvable:$true] %s138
      %141 = dma.vmem_to_hbm [thread:$0]  %s137, 128, %s139, [#allocation3]
    $region25: #{tpu_custom_call.1} parent=1 // pred_fallthru
      _
    // Predicated region
    $region26: #{tpu_custom_call.1} parent=1 // pred_check
      _
    $region27: #{tpu_custom_call.1} parent=1 // pred_check_branch
      %143 = sbr.rel (0) target = $region29
    $region28: #{tpu_custom_call.1} parent=1 // pred_region
      %145 = vsyncadd [#allocation5], 0
      %s147 = sshll.u32 [#allocation4], 4
      %s148 = int_to_ptr.vmem [resolvable:$true] %s147
      %s149 = sshll.u32 %s6, 4
      %s150 = int_to_ptr.hbm [resolvable:$true] %s149
      %152 = dma.vmem_to_hbm [thread:$0]  %s148, 128, %s150, [#allocation5]
    $region29: #{tpu_custom_call.1} parent=1 // pred_fallthru
      _
    // Predicated region
    $region30: #{tpu_custom_call.1} parent=1 // pred_check
      _
    $region31: #{tpu_custom_call.1} parent=1 // pred_check_branch
      %154 = sbr.rel (0) target = $region33
    $region32: #{tpu_custom_call.1} parent=1 // pred_region
      %156 = dma.done [#allocation3], 128
    $region33: #{tpu_custom_call.1} parent=1 // pred_fallthru
      _
    // Predicated region
    $region34: #{tpu_custom_call.1} parent=1 // pred_check
      _
    $region35: #{tpu_custom_call.1} parent=1 // pred_check_branch
      %158 = sbr.rel (0) target = $region37
    $region36: #{tpu_custom_call.1} parent=1 // pred_region
      %160 = dma.done [#allocation5], 128
    $region37: #{tpu_custom_call.1} parent=1 // pred_fallthru
      _
    %161 = vsyncpa [#allocation3], 1
    %162 = vsyncpa [#allocation5], 1

</llo_original>
